<compile_context>
chip_gen: v7x
topology: tpu7x:2x2x1
jax: 0.10.0
libtpu: 0.0.40
codegen_flags: <defaults>
</compile_context>

<pallas_src>
import jax
import jax.numpy as jnp
from jax.experimental import pallas as pl
from jax.experimental.pallas import tpu as pltpu

BN_EPS = 1e-5
LN_EPS = 1e-5


def _round_up(v, m):
    return (v + m - 1) // m * m


def _vmem_limit(tile_bytes, resident_bytes):
    # Double-buffered tiles + resident blocks + headroom, derived from actual
    # buffer sizes (stays well inside v7x's 64 MiB for these shapes; v5e/v6e
    # have 128 MiB so larger requests are also safe there).
    need = 2 * tile_bytes + resident_bytes + (4 << 20)
    return int(max(need, 32 << 20))


def _pick_row_tile(n_pad):
    # >= 2 row tiles so the "parallel" axis can shard across v7x's two TCs;
    # 256 for larger graphs to amortize per-step overhead.
    if n_pad % 256 == 0 and n_pad // 256 >= 2:
        return 256
    return 128


def _pick_k_tile(n_pad):
    for t in (512, 256, 128):
        if n_pad % t == 0:
            return t
    return 128


# ----------------------------------------------------------------------------
# GCN layer, stage 1: row-tiled feature transform  X @ [W | Wr]  (bf16 in/out)
# ----------------------------------------------------------------------------
def gcn_transform_kernel(x_ref, wcat_ref, xw_ref, xres_ref):
    h = wcat_ref.shape[1] // 2
    xcat = jnp.dot(x_ref[...], wcat_ref[...], preferred_element_type=jnp.float32)
    xw_ref[...] = xcat[:, :h].astype(jnp.bfloat16)
    xres_ref[...] = xcat[:, h:].astype(jnp.bfloat16)


# ----------------------------------------------------------------------------
# GCN layer, stage 2: A_hat @ XW (XW resident in VMEM) with fused epilogue
#   BN(eval, conv/residual biases folded into shift) -> +residual -> ReLU -> LN
# ----------------------------------------------------------------------------
def gcn_aggregate_kernel(a_ref, xw_ref, xres_ref, bns_ref, bnb_ref,
                         lng_ref, lnb_ref, o_ref, acc_ref):
    k = pl.program_id(1)
    tk = a_ref.shape[1]

    @pl.when(k == 0)
    def _():
        acc_ref[...] = jnp.zeros_like(acc_ref)

    start = pl.multiple_of(k * tk, tk)
    acc_ref[...] += jnp.dot(a_ref[...], xw_ref[pl.ds(start, tk), :],
                            preferred_element_type=jnp.float32)

    @pl.when(k == pl.num_programs(1) - 1)
    def _():
        # bnb already contains conv_bias*bns + bn_shift + residual_bias.
        h = acc_ref[...] * bns_ref[...] + bnb_ref[...]
        h = h + xres_ref[...].astype(jnp.float32)     # residual projection
        h = jnp.maximum(h, 0.0)                       # ReLU
        mu = jnp.mean(h, axis=-1, keepdims=True)      # shared LayerNorm
        var = jnp.mean((h - mu) * (h - mu), axis=-1, keepdims=True)
        y = (h - mu) * jax.lax.rsqrt(var + LN_EPS) * lng_ref[...] + lnb_ref[...]
        o_ref[...] = y.astype(o_ref.dtype)


def gcn_layer(a_hat_bf16, x_bf16, wcat_bf16, bns, bnbf, lng, lnb, *, tn, tk):
    n_pad, cin = x_bf16.shape
    hidden = wcat_bf16.shape[1] // 2
    assert n_pad % tn == 0 and n_pad % tk == 0

    t_tiles = tn * cin * 2 + 2 * tn * hidden * 2
    t_res = cin * 2 * hidden * 2
    xw, xres = pl.pallas_call(
        gcn_transform_kernel,
        out_shape=(jax.ShapeDtypeStruct((n_pad, hidden), jnp.bfloat16),
                   jax.ShapeDtypeStruct((n_pad, hidden), jnp.bfloat16)),
        grid_spec=pltpu.PrefetchScalarGridSpec(
            num_scalar_prefetch=0,
            grid=(n_pad // tn,),
            in_specs=[pl.BlockSpec((tn, cin), lambda i: (i, 0)),
                      pl.BlockSpec((cin, 2 * hidden), lambda i: (0, 0))],
            out_specs=[pl.BlockSpec((tn, hidden), lambda i: (i, 0)),
                       pl.BlockSpec((tn, hidden), lambda i: (i, 0))]),
        compiler_params=pltpu.CompilerParams(
            dimension_semantics=("parallel",),
            vmem_limit_bytes=_vmem_limit(t_tiles, t_res)),
    )(x_bf16, wcat_bf16)

    # TODO(synk): for very large N (resident XW > ~16-24 MiB on v7x), fall back
    #             to a (tk, hidden)-tiled XW spec instead of the resident block.
    a_tiles = tn * tk * 2 + tn * hidden * 2 + tn * hidden * 2
    a_res = n_pad * hidden * 2 + 4 * hidden * 4 + tn * hidden * 4
    out = pl.pallas_call(
        gcn_aggregate_kernel,
        out_shape=jax.ShapeDtypeStruct((n_pad, hidden), jnp.bfloat16),
        grid_spec=pltpu.PrefetchScalarGridSpec(
            num_scalar_prefetch=0,
            grid=(n_pad // tn, n_pad // tk),              # reduction axis last
            in_specs=[pl.BlockSpec((tn, tk), lambda i, k: (i, k)),
                      pl.BlockSpec((n_pad, hidden), lambda i, k: (0, 0)),  # resident XW
                      pl.BlockSpec((tn, hidden), lambda i, k: (i, 0)),
                      pl.BlockSpec((1, hidden), lambda i, k: (0, 0)),
                      pl.BlockSpec((1, hidden), lambda i, k: (0, 0)),
                      pl.BlockSpec((1, hidden), lambda i, k: (0, 0)),
                      pl.BlockSpec((1, hidden), lambda i, k: (0, 0))],
            out_specs=pl.BlockSpec((tn, hidden), lambda i, k: (i, 0)),
            scratch_shapes=[pltpu.VMEM((tn, hidden), jnp.float32)]),
        compiler_params=pltpu.CompilerParams(
            dimension_semantics=("parallel", "arbitrary"),
            vmem_limit_bytes=_vmem_limit(a_tiles, a_res)),
    )(a_hat_bf16, xw, xres, bns, bnbf, lng, lnb)
    return out


# ----------------------------------------------------------------------------
# Link-prediction head: pair features + attention + 5-layer MLP (edge-tiled).
# ----------------------------------------------------------------------------
def link_pred_kernel(src_ref, dst_ref,
                     a1s_ref, a1d_ref, a1b_ref, a2w_ref, a2b_ref,
                     w1s_ref, w1d_ref, w1f_ref, s1_ref, t1_ref,
                     w2_ref, s2_ref, t2_ref,
                     w3_ref, s3_ref, t3_ref,
                     w4_ref, s4_ref, t4_ref,
                     w5t_ref, b5_ref,
                     o_ref):
    src_bf = src_ref[...]
    dst_bf = dst_ref[...]
    src = src_bf.astype(jnp.float32)
    dst = dst_bf.astype(jnp.float32)

    dot = jnp.sum(src * dst, axis=1, keepdims=True)
    diff = src - dst
    l2 = jnp.sqrt(jnp.sum(diff * diff, axis=1, keepdims=True))
    l1 = jnp.sum(jnp.abs(diff), axis=1, keepdims=True)
    sn = jnp.sqrt(jnp.sum(src * src, axis=1, keepdims=True))
    dn = jnp.sqrt(jnp.sum(dst * dst, axis=1, keepdims=True))
    cos = dot / (jnp.maximum(sn, 1e-8) * jnp.maximum(dn, 1e-8))
    euc = 1.0 / (1.0 + l2)

    # attention(concat([src, dst])): split bf16 matmuls; Linear(H,1) as a
    # VPU multiply + lane reduce (avoids a wasteful N=1 MXU pass).
    att = (jnp.dot(src_bf, a1s_ref[...], preferred_element_type=jnp.float32)
           + jnp.dot(dst_bf, a1d_ref[...], preferred_element_type=jnp.float32)
           + a1b_ref[...])
    att = jnp.maximum(att, 0.0)
    att = jnp.sum(att * a2w_ref[...], axis=1, keepdims=True) + a2b_ref[...]
    att = jax.nn.sigmoid(att)

    src_w = (src * att).astype(jnp.bfloat16)
    dst_w = (dst * att).astype(jnp.bfloat16)

    # MLP layer 1 on combined = [src_w, dst_w, dot, l2, l1, cos, euc]:
    # two H-wide bf16 matmuls + five rank-1 VPU updates for the scalar feats.
    w1f = w1f_ref[...]
    h = (jnp.dot(src_w, w1s_ref[...], preferred_element_type=jnp.float32)
         + jnp.dot(dst_w, w1d_ref[...], preferred_element_type=jnp.float32)
         + dot * w1f[0:1] + l2 * w1f[1:2] + l1 * w1f[2:3]
         + cos * w1f[3:4] + euc * w1f[4:5])
    h = jnp.maximum(h * s1_ref[...] + t1_ref[...], 0.0)    # Linear-bias folded in t

    h = jnp.dot(h.astype(jnp.bfloat16), w2_ref[...], preferred_element_type=jnp.float32)
    h = jnp.maximum(h * s2_ref[...] + t2_ref[...], 0.0)

    h = jnp.dot(h.astype(jnp.bfloat16), w3_ref[...], preferred_element_type=jnp.float32)
    h = jnp.maximum(h * s3_ref[...] + t3_ref[...], 0.0)

    h = jnp.dot(h.astype(jnp.bfloat16), w4_ref[...], preferred_element_type=jnp.float32)
    h = jnp.maximum(h * s4_ref[...] + t4_ref[...], 0.0)

    # final Linear(H//4, 1): (1,H//4) x (te,H//4)^T -> (1, te) lane-dense row.
    logit = jax.lax.dot_general(
        w5t_ref[...], h.astype(jnp.bfloat16),
        dimension_numbers=(((1,), (1,)), ((), ())),
        preferred_element_type=jnp.float32) + b5_ref[...]
    o_ref[...] = logit


def link_predict(src, dst, lp):
    e, hidden = src.shape
    e_pad = _round_up(e, 128)
    te = 256 if (e_pad % 256 == 0 and e_pad >= 512) else 128
    if e_pad != e:
        src = jnp.pad(src, ((0, e_pad - e), (0, 0)))
        dst = jnp.pad(dst, ((0, e_pad - e), (0, 0)))

    weights = (lp["a1s"], lp["a1d"], lp["a1b"], lp["a2w"], lp["a2b"],
               lp["w1s"], lp["w1d"], lp["w1f"], lp["s1"], lp["t1"],
               lp["w2"], lp["s2"], lp["t2"],
               lp["w3"], lp["s3"], lp["t3"],
               lp["w4"], lp["s4"], lp["t4"],
               lp["w5t"], lp["b5"])
    edge_spec = pl.BlockSpec((te, hidden), lambda i: (i, 0))
    in_specs = [edge_spec, edge_spec] + [
        pl.BlockSpec(w.shape, lambda i: (0, 0)) for w in weights]   # resident weights

    tile_bytes = 2 * te * hidden * 2 + te * 4
    res_bytes = sum(int(w.size) * w.dtype.itemsize for w in weights)
    out = pl.pallas_call(
        link_pred_kernel,
        out_shape=jax.ShapeDtypeStruct((e_pad // te, te), jnp.float32),
        grid_spec=pltpu.PrefetchScalarGridSpec(
            num_scalar_prefetch=0,
            grid=(e_pad // te,),
            in_specs=in_specs,
            out_specs=pl.BlockSpec((1, te), lambda i: (i, 0))),
        compiler_params=pltpu.CompilerParams(
            dimension_semantics=("parallel",),
            vmem_limit_bytes=_vmem_limit(tile_bytes, res_bytes)),
    )(src, dst, *weights)
    return out.reshape(-1)[:e]


# ----------------------------------------------------------------------------
# Glue: dense normalized adjacency, parameter init, full forward.
# ----------------------------------------------------------------------------
def build_norm_adjacency(edge_index, num_nodes_pad):
    src, dst = edge_index[0], edge_index[1]
    a = jnp.zeros((num_nodes_pad, num_nodes_pad), jnp.float32).at[dst, src].add(1.0)
    a = a + 2.0 * jnp.eye(num_nodes_pad, dtype=jnp.float32)  # improved=True self loops
    deg = a.sum(axis=1)                                      # padded rows: deg = 2, no nan
    dinv = jax.lax.rsqrt(deg)
    return dinv[:, None] * a * dinv[None, :]


def _uni(key, shape, scale=0.1):
    return jax.random.uniform(key, shape, jnp.float32, -scale, scale)


def init_gcn_params(key, in_c, hidden, num_layers):
    inv = (1.0 + BN_EPS) ** -0.5          # BN eval fold (running mean=0, var=1)
    layers = []
    for i in range(num_layers):
        cin = in_c if i == 0 else hidden
        key, k1, k2, k3, k4 = jax.random.split(key, 5)
        w = _uni(k1, (cin, hidden))
        b = _uni(k2, (1, hidden))
        wr = _uni(k3, (cin, hidden))
        br = _uni(k4, (1, hidden))
        bns = jnp.full((1, hidden), inv, jnp.float32)
        # (A@XW + b)*bns + bn_shift + (X@Wr + br) == (A@XW)*bns + X@Wr + (b*bns + bn_shift + br)
        bnbf = b * bns + jnp.zeros((1, hidden), jnp.float32) + br
        layers.append(dict(
            wcat=jnp.concatenate([w, wr], axis=1).astype(jnp.bfloat16),
            bns=bns, bnbf=bnbf))
    # single shared LayerNorm (as in the PyTorch module)
    ln = dict(g=jnp.ones((1, hidden), jnp.float32),
              b=jnp.zeros((1, hidden), jnp.float32))
    return layers, ln


def init_link_params(key, hidden):
    h = hidden
    ks = jax.random.split(key, 17)
    inv = (1.0 + BN_EPS) ** -0.5

    def bn_fold(bias, c):
        s = jnp.full((1, c), inv, jnp.float32)
        return s, bias * s               # Linear bias folded through eval BN

    b1 = _uni(ks[8], (1, 2 * h)); s1, t1 = bn_fold(b1, 2 * h)
    b2 = _uni(ks[10], (1, h)); s2, t2 = bn_fold(b2, h)
    b3 = _uni(ks[12], (1, h // 2)); s3, t3 = bn_fold(b3, h // 2)
    b4 = _uni(ks[14], (1, h // 4)); s4, t4 = bn_fold(b4, h // 4)
    w1f = jnp.pad(_uni(ks[7], (5, 2 * h)), ((0, 3), (0, 0)))    # pad 5 -> 8 sublanes
    return dict(
        a1s=_uni(ks[0], (h, h)).astype(jnp.bfloat16),
        a1d=_uni(ks[1], (h, h)).astype(jnp.bfloat16),
        a1b=_uni(ks[2], (1, h)),
        a2w=_uni(ks[3], (1, h)),
        a2b=_uni(ks[4], (1, 1)),
        w1s=_uni(ks[5], (h, 2 * h)).astype(jnp.bfloat16),
        w1d=_uni(ks[6], (h, 2 * h)).astype(jnp.bfloat16),
        w1f=w1f, s1=s1, t1=t1,
        w2=_uni(ks[9], (2 * h, h)).astype(jnp.bfloat16), s2=s2, t2=t2,
        w3=_uni(ks[11], (h, h // 2)).astype(jnp.bfloat16), s3=s3, t3=t3,
        w4=_uni(ks[13], (h // 2, h // 4)).astype(jnp.bfloat16), s4=s4, t4=t4,
        w5t=_uni(ks[15], (h // 4, 1)).T.astype(jnp.bfloat16),   # (1, h//4)
        b5=_uni(ks[16], (1, 1)),
    )


def gcn_link_predictor_forward(x, edge_index, edge_pairs, gcn_params, ln_params,
                               lp_params):
    n = x.shape[0]
    n_pad = _round_up(n, 128)
    tn = _pick_row_tile(n_pad)
    tk = _pick_k_tile(n_pad)

    # TODO(synk): quantize A_hat/XW to fp8 (v7x) or int8+scale (v5e/v6e) to
    #             halve the HBM-bound A stream; bf16 kept here for simplicity.
    a_hat = build_norm_adjacency(edge_index, n_pad).astype(jnp.bfloat16)
    node = jnp.pad(x, ((0, n_pad - n), (0, 0))).astype(jnp.bfloat16)

    for p in gcn_params:
        node = gcn_layer(a_hat, node, p["wcat"], p["bns"], p["bnbf"],
                         ln_params["g"], ln_params["b"], tn=tn, tk=tk)

    # TODO(synk): for very large E, gather src/dst inside the link kernel via
    #             scalar-prefetched pair indices + DMA instead of XLA gather.
    src = node[edge_pairs[0]]
    dst = node[edge_pairs[1]]
    return link_predict(src, dst, lp_params)


if __name__ == "__main__":
    N, IN_C, HIDDEN, NUM_LAYERS = 256, 16, 128, 4
    N_DIRECTED_EDGES, N_PAIRS = 512, 96

    key = jax.random.PRNGKey(0)
    k_x, k_es, k_eo, k_p0, k_p1, k_gcn, k_lp = jax.random.split(key, 7)

    x = jax.random.normal(k_x, (N, IN_C), jnp.float32)

    e_src = jax.random.randint(k_es, (N_DIRECTED_EDGES,), 0, N)
    e_off = jax.random.randint(k_eo, (N_DIRECTED_EDGES,), 1, N)
    e_dst = (e_src + e_off) % N                       # no explicit self loops
    edge_index = jnp.stack([jnp.concatenate([e_src, e_dst]),
                            jnp.concatenate([e_dst, e_src])]).astype(jnp.int32)

    edge_pairs = jnp.stack([jax.random.randint(k_p0, (N_PAIRS,), 0, N),
                            jax.random.randint(k_p1, (N_PAIRS,), 0, N)]).astype(jnp.int32)

    gcn_params, ln_params = init_gcn_params(k_gcn, IN_C, HIDDEN, NUM_LAYERS)
    lp_params = init_link_params(k_lp, HIDDEN)

    scores = gcn_link_predictor_forward(x, edge_index, edge_pairs,
                                        gcn_params, ln_params, lp_params)
    scores = jax.block_until_ready(scores)

    assert scores.shape == (N_PAIRS,)
    assert bool(jnp.all(jnp.isfinite(scores)))
    print("KERNEL_OK")
</pallas_src>

<mosaic_0001>
module attributes {stable_mosaic.version = 11 : i64} {
  func.func @gcn_transform_kernel(%arg0: i32, %arg1: memref<128x16xbf16, #tpu.memory_space<vmem>>, %arg2: memref<16x256xbf16, #tpu.memory_space<vmem>>, %arg3: memref<128x128xbf16, #tpu.memory_space<vmem>>, %arg4: memref<128x128xbf16, #tpu.memory_space<vmem>>) attributes {dimension_semantics = [#tpu.dimension_semantics<parallel>], iteration_bounds = array<i64: 2>, scalar_prefetch = 0 : i64, scratch_operands = 0 : i64, tpu.core_type = #tpu.core_type<tc>, window_params = [{transform_indices = @transform_0, window_bounds = array<i64: 128, 16>}, {pipeline_mode = #tpu.pipeline_mode<synchronous>, transform_indices = @transform_1, window_bounds = array<i64: 16, 256>}, {transform_indices = @transform_2, window_bounds = array<i64: 128, 128>}, {transform_indices = @transform_3, window_bounds = array<i64: 128, 128>}]} {
    %c0 = arith.constant 0 : index
    %c0_0 = arith.constant 0 : index
    %0 = vector.load %arg1[%c0, %c0_0] : memref<128x16xbf16, #tpu.memory_space<vmem>>, vector<128x16xbf16>
    %c0_1 = arith.constant 0 : index
    %c0_2 = arith.constant 0 : index
    %1 = vector.load %arg2[%c0_1, %c0_2] : memref<16x256xbf16, #tpu.memory_space<vmem>>, vector<16x256xbf16>
    %cst = arith.constant dense<0.000000e+00> : vector<128x256xf32>
    %2 = tpu.matmul %0, %1, %cst {dimension_numbers = #tpu.dot_dimension_numbers<[1], [0], [0], [1], [0, 0, 1, 1], [], []>} : vector<128x16xbf16>, vector<16x256xbf16>, vector<128x256xf32> -> vector<128x256xf32>
    %3 = vector.extract_strided_slice %2 {offsets = [0, 0], sizes = [128, 128], strides = [1, 1]} : vector<128x256xf32> to vector<128x128xf32>
    %4 = arith.truncf %3 : vector<128x128xf32> to vector<128x128xbf16>
    %c0_3 = arith.constant 0 : index
    %c0_4 = arith.constant 0 : index
    %5 = vector.load %arg3[%c0_3, %c0_4] : memref<128x128xbf16, #tpu.memory_space<vmem>>, vector<128x128xbf16>
    tpu.vector_store %arg3[%c0_3, %c0_4], %4 {strides = array<i32>} : memref<128x128xbf16, #tpu.memory_space<vmem>>, vector<128x128xbf16>,
    %6 = vector.extract_strided_slice %2 {offsets = [0, 128], sizes = [128, 128], strides = [1, 1]} : vector<128x256xf32> to vector<128x128xf32>
    %7 = arith.truncf %6 : vector<128x128xf32> to vector<128x128xbf16>
    %c0_5 = arith.constant 0 : index
    %c0_6 = arith.constant 0 : index
    %8 = vector.load %arg4[%c0_5, %c0_6] : memref<128x128xbf16, #tpu.memory_space<vmem>>, vector<128x128xbf16>
    tpu.vector_store %arg4[%c0_5, %c0_6], %7 {strides = array<i32>} : memref<128x128xbf16, #tpu.memory_space<vmem>>, vector<128x128xbf16>,
    return
  }
  func.func @transform_0(%arg0: i32) -> (i32, i32) {
    %c0_i32 = arith.constant 0 : i32
    %c0_i32_0 = arith.constant 0 : i32
    return %arg0, %c0_i32 : i32, i32
  }
  func.func @transform_1(%arg0: i32) -> (i32, i32) {
    %c0_i32 = arith.constant 0 : i32
    %c0_i32_0 = arith.constant 0 : i32
    %c0_i32_1 = arith.constant 0 : i32
    return %c0_i32, %c0_i32_0 : i32, i32
  }
  func.func @transform_2(%arg0: i32) -> (i32, i32) {
    %c0_i32 = arith.constant 0 : i32
    %c0_i32_0 = arith.constant 0 : i32
    return %arg0, %c0_i32 : i32, i32
  }
  func.func @transform_3(%arg0: i32) -> (i32, i32) {
    %c0_i32 = arith.constant 0 : i32
    %c0_i32_0 = arith.constant 0 : i32
    return %arg0, %c0_i32 : i32, i32
  }
}

</mosaic_0001>

<llo_original>
// kernel: tpu_custom_call.1
$region0: #{tpu_custom_call.1}
  #allocation0 [shape = 'u32[]', space=smem, size = 0x4, offset = 0x4, fixed_abs, tag = 'smem constant byte address 0x4 - core index']
  #allocation1 [shape = 'u32[144,128]{1,0:T(1,128)}', space=vmem, size = 0x12000, scoped, tag = 'internal scratch']
  %s0 = inlined_call_operand.vmem [shape: bf16[256,16], index: 0, kind: input, shape index: {}]
  %s1 = inlined_call_operand.vmem [shape: bf16[16,256], index: 1, kind: input, shape index: {}]
  %s2 = inlined_call_operand.hbm [shape: bf16[256,128], index: 2, kind: output, shape index: {0}]
  %s3 = inlined_call_operand.hbm [shape: bf16[256,128], index: 3, kind: output, shape index: {1}]
  %4 = xla_tuple %s2, %s3
  %s5 = sld [smem:[#allocation0]]
  $region49: #{tpu_custom_call.1} parent=0
    _
  %s7 = ssub.s32 1, %s5
  %s8 = scalar_select 0, %s7, %s5
  $region1: #{tpu_custom_call.1} parent=0
    #allocation2 [shape = 'u8[65536]{0}', space=vmem, size = 0x10000, scoped, tag = 'output window, operand 0']
    #allocation3 [shape = 's32[2]{0}', space=sflag, size = 0x8, scoped, tag = 'scoped memory for tpu_custom_call.1']
    #allocation4 [shape = 'u8[65536]{0}', space=vmem, size = 0x10000, scoped, tag = 'output window, operand 1']
    #allocation5 [shape = 's32[2]{0}', space=sflag, size = 0x8, scoped, tag = 'scoped memory for tpu_custom_call.1']
    %9 = vsyncpa [#allocation3], 0
    %s10 = scalar_lea.sflag [#allocation3], 1
    %11 = vsyncpa %s10, 0
    %12 = vsyncpa [#allocation5], 0
    %s13 = scalar_lea.sflag [#allocation5], 1
    %14 = vsyncpa %s13, 0
    loop: start=0, step=1, limit=4
    $region2: #{tpu_custom_call.1} parent=1 // loop_pre_header
      _
    $region3: #{tpu_custom_call.1} parent=1 // loop_header
      %s16 = sphi 0, %s20
      %p17 = scmp.ge.s32.totalorder %s16, 4
      %s26 = sphi 0, %s28
      %s29 = sphi 0, %s26
      %s30 = sphi 0, %s29
      %s46 = sphi 0, %s30
      %s50 = sphi 0, %s50
      %s52 = sphi 0, %s50
      %s53 = sphi 0, %s52
      %s67 = sphi 0, %s53
      %s73 = sphi 0, %s75
      %s76 = sphi 0, %s73
      %s77 = sphi 0, %s76
      %s93 = sphi 0, %s77
      %s99 = sphi 0, %s101
      %s102 = sphi 0, %s99
      %s103 = sphi 0, %s102
      %s119 = sphi 0, %s103
    $region4: #{tpu_custom_call.1} parent=1 // loop_header_branch
      %19 = sbr.rel (%p17) target = $region8
    $region5: #{tpu_custom_call.1} parent=1 // loop_body
      %s21 = ssub.s32 %s16, 1
      %s22 = ssub.s32 %s16, 2
      %s23 = sadd.s32 %s16, 1
      %s24 = ssub.s32 %s16, %s23
      %p25 = scmp.eq.s32.totalorder %s24, 0
      %s27 = sadd.s32 %s26, 1
      %s28 = scalar_select %p25, %s26, %s27
      %p31 = pneg %p25
      %p32 = scmp.eq.s32.totalorder %s16, 1
      %p33 = por %p31, %p32
      %p34 = scmp.ne.s32.totalorder %s26, %s29
      %p35 = scmp.eq.s32.totalorder %s16, 0
      %p36 = por %p34, %p35
      %p37 = scmp.ne.s32.totalorder %s26, %s29
      %p38 = scmp.eq.s32.totalorder %s21, 1
      %p39 = por %p37, %p38
      %p40 = scmp.ne.s32.totalorder %s29, %s30
      %p41 = scmp.eq.s32.totalorder %s21, 0
      %p42 = por %p40, %p41
      %p43 = scmp.ne.s32.totalorder %s29, %s30
      %p44 = scmp.eq.s32.totalorder %s22, 1
      %p45 = por %p43, %p44
      %p47 = scmp.ne.s32.totalorder %s30, %s46
      %p48 = scmp.eq.s32.totalorder %s22, 0
      %p49 = por %p47, %p48
      %s51 = sadd.s32 %s50, 1
      %p54 = scmp.eq.s32.totalorder %s16, 1
      %p55 = scmp.ne.s32.totalorder %s50, %s52
      %p56 = scmp.eq.s32.totalorder %s16, 0
      %p57 = por %p55, %p56
      %p58 = scmp.ne.s32.totalorder %s50, %s52
      %p59 = scmp.eq.s32.totalorder %s21, 1
      %p60 = por %p58, %p59
      %p61 = scmp.ne.s32.totalorder %s52, %s53
      %p62 = scmp.eq.s32.totalorder %s21, 0
      %p63 = por %p61, %p62
      %p64 = scmp.ne.s32.totalorder %s52, %s53
      %p65 = scmp.eq.s32.totalorder %s22, 1
      %p66 = por %p64, %p65
      %p68 = scmp.ne.s32.totalorder %s53, %s67
      %p69 = scmp.eq.s32.totalorder %s22, 0
      %p70 = por %p68, %p69
      %s71 = ssub.s32 %s16, %s23
      %p72 = scmp.eq.s32.totalorder %s71, 0
      %s74 = sadd.s32 %s73, 1
      %s75 = scalar_select %p72, %s73, %s74
      %p78 = pneg %p72
      %p79 = scmp.eq.s32.totalorder %s16, 1
      %p80 = por %p78, %p79
      %p81 = scmp.ne.s32.totalorder %s73, %s76
      %p82 = scmp.eq.s32.totalorder %s16, 0
      %p83 = por %p81, %p82
      %p84 = scmp.ne.s32.totalorder %s73, %s76
      %p85 = scmp.eq.s32.totalorder %s21, 1
      %p86 = por %p84, %p85
      %p87 = scmp.ne.s32.totalorder %s76, %s77
      %p88 = scmp.eq.s32.totalorder %s21, 0
      %p89 = por %p87, %p88
      %p90 = scmp.ne.s32.totalorder %s76, %s77
      %p91 = scmp.eq.s32.totalorder %s22, 1
      %p92 = por %p90, %p91
      %p94 = scmp.ne.s32.totalorder %s77, %s93
      %p95 = scmp.eq.s32.totalorder %s22, 0
      %p96 = por %p94, %p95
      %s97 = ssub.s32 %s16, %s23
      %p98 = scmp.eq.s32.totalorder %s97, 0
      %s100 = sadd.s32 %s99, 1
      %s101 = scalar_select %p98, %s99, %s100
      %p104 = pneg %p98
      %p105 = scmp.eq.s32.totalorder %s16, 1
      %p106 = por %p104, %p105
      %p107 = scmp.ne.s32.totalorder %s99, %s102
      %p108 = scmp.eq.s32.totalorder %s16, 0
      %p109 = por %p107, %p108
      %p110 = scmp.ne.s32.totalorder %s99, %s102
      %p111 = scmp.eq.s32.totalorder %s21, 1
      %p112 = por %p110, %p111
      %p113 = scmp.ne.s32.totalorder %s102, %s103
      %p114 = scmp.eq.s32.totalorder %s21, 0
      %p115 = por %p113, %p114
      %p116 = scmp.ne.s32.totalorder %s102, %s103
      %p117 = scmp.eq.s32.totalorder %s22, 1
      %p118 = por %p116, %p117
      %p120 = scmp.ne.s32.totalorder %s103, %s119
      %p121 = scmp.eq.s32.totalorder %s22, 0
      %p122 = por %p120, %p121
      %p123 = scmp.le.s32.totalorder 1, %s16
      %p124 = scmp.lt.s32.totalorder %s16, 3
      %p125 = pnand %p123, %p124
      %p126 = pneg %p125
      // Predicated region
      $region9: #{tpu_custom_call.1} parent=5 // pred_check
        _
      $region10: #{tpu_custom_call.1} parent=5 // pred_check_branch
        %128 = sbr.rel (%p125) target = $region12
      $region11: #{tpu_custom_call.1} parent=5 // pred_region
        %s129 = ssub.s32 %s16, 1
        // Predicated region
        $region13: #{tpu_custom_call.1} parent=11 // pred_check
          %p130 = pneg %p63
        $region14: #{tpu_custom_call.1} parent=11 // pred_check_branch
          %132 = sbr.rel (%p130) target = $region16
        $region15: #{tpu_custom_call.1} parent=11 // pred_region
          _
        $region16: #{tpu_custom_call.1} parent=11 // pred_fallthru
          _
      $region12: #{tpu_custom_call.1} parent=5 // pred_fallthru
        _
      %p133 = scmp.lt.s32.totalorder %s16, 2
      // Predicated region
      $region17: #{tpu_custom_call.1} parent=5 // pred_check
        %p134 = pneg %p133
      $region18: #{tpu_custom_call.1} parent=5 // pred_check_branch
        %136 = sbr.rel (%p134) target = $region20
      $region19: #{tpu_custom_call.1} parent=5 // pred_region
        // Predicated region
        $region21: #{tpu_custom_call.1} parent=19 // pred_check
          %p137 = pneg %p36
        $region22: #{tpu_custom_call.1} parent=19 // pred_check_branch
          %139 = sbr.rel (%p137) target = $region24
        $region23: #{tpu_custom_call.1} parent=19 // pred_region
          %s140 = smul.u32 16, %s16
          %p141 = scmp.lt.s32.totalorder %s140, 31
          %s142 = scalar_select %p141, %s140, 31
          %s143 = smul.addr %s142, 4
          %s144 = scalar_lea.vmem %s0, %s143
          %s145 = smul.u32 16, %s16
        $region24: #{tpu_custom_call.1} parent=19 // pred_fallthru
          _
      $region20: #{tpu_custom_call.1} parent=5 // pred_fallthru
        _
      %p146 = scmp.le.s32.totalorder 1, %s16
      %p147 = scmp.lt.s32.totalorder %s16, 3
      %p148 = pnand %p146, %p147
      %p149 = pneg %p148
      // Predicated region
      $region25: #{tpu_custom_call.1} parent=5 // pred_check
        _
      $region26: #{tpu_custom_call.1} parent=5 // pred_check_branch
        %151 = sbr.rel (%p148) target = $region28
      $region27: #{tpu_custom_call.1} parent=5 // pred_region
        %s152 = ssub.s32 %s16, 1
        %s153 = smul.u32 16, %s21
        %p154 = scmp.lt.s32.totalorder %s153, 31
        %s155 = scalar_select %p154, %s153, 31
        %s156 = smul.addr %s155, 4
        %s157 = scalar_lea.vmem %s0, %s156
        %p158 = pneg %p42
        %p159 = pneg %p39
        %p160 = pneg %p63
        %p161 = pneg %p60
        %p162 = pneg %p89
        %p163 = pneg %p86
        %s164 = sand.u32 %s76, 1
        %s165 = scalar_lea.sflag [#allocation3], %s164
        %s166 = sand.u32 %s76, 1
        %s167 = smul.addr %s166, 64
        %s168 = scalar_lea.vmem [#allocation2], %s167
        %p169 = pneg %p115
        %p170 = pneg %p112
        %s171 = sand.u32 %s102, 1
        %s172 = scalar_lea.sflag [#allocation5], %s171
        %s173 = sand.u32 %s102, 1
        %s174 = smul.addr %s173, 64
        %s175 = scalar_lea.vmem [#allocation4], %s174
        %s176 = smul.u32 16, %s21
        %p177 = scmp.lt.s32.totalorder %s176, 31
        %s178 = scalar_select %p177, %s176, 31
        %s179 = smul.addr %s178, 4
        %s180 = scalar_lea.vmem %s0, %s179
        %s181 = smul.u32 16, %s21
        %s182 = smul.u32 16, %s21
        %s183 = smul.u32 16, %s21
        %v185 = vld [vmem:[%s180] sm:$0xf]
        %v186 = vld [vmem:[%s180 + $0x4] sm:$0xf]
        %v187 = vld [vmem:[%s180 + $0x8] sm:$0xf]
        %v188 = vld [vmem:[%s180 + $0xc] sm:$0xf]
        %v189 = vld [vmem:[%s180 + $0x10] sm:$0xf]
        %v190 = vld [vmem:[%s180 + $0x14] sm:$0xf]
        %v191 = vld [vmem:[%s180 + $0x18] sm:$0xf]
        %v192 = vld [vmem:[%s180 + $0x1c] sm:$0xf]
        %v193 = vld [vmem:[%s180 + $0x20] sm:$0xf]
        %v194 = vld [vmem:[%s180 + $0x24] sm:$0xf]
        %v195 = vld [vmem:[%s180 + $0x28] sm:$0xf]
        %v196 = vld [vmem:[%s180 + $0x2c] sm:$0xf]
        %v197 = vld [vmem:[%s180 + $0x30] sm:$0xf]
        %v198 = vld [vmem:[%s180 + $0x34] sm:$0xf]
        %v199 = vld [vmem:[%s180 + $0x38] sm:$0xf]
        %v200 = vld [vmem:[%s180 + $0x3c] sm:$0xf]
        %v201 = vld [vmem:[%s1] sm:$0xff]
        %v202 = vld [vmem:[%s1 + $0x8] sm:$0xff]
        %v219 = vunpack.c.l.b16 %v185
        %v220 = vunpack.c.l.b16 %v186
        %v221 = vunpack.c.l.b16 %v187
        %v222 = vunpack.c.l.b16 %v188
        %v223 = vunpack.c.l.b16 %v189
        %v224 = vunpack.c.l.b16 %v190
        %v225 = vunpack.c.l.b16 %v191
        %v226 = vunpack.c.l.b16 %v192
        %v227 = vunpack.c.l.b16 %v193
        %v228 = vunpack.c.l.b16 %v194
        %v229 = vunpack.c.l.b16 %v195
        %v230 = vunpack.c.l.b16 %v196
        %v231 = vunpack.c.l.b16 %v197
        %v232 = vunpack.c.l.b16 %v198
        %v233 = vunpack.c.l.b16 %v199
        %v234 = vunpack.c.l.b16 %v200
        %v235 = vpack.c.b16 %v220, %v219
        %v236 = vpack.c.b16 %v222, %v221
        %v237 = vpack.c.b16 %v224, %v223
        %v238 = vpack.c.b16 %v226, %v225
        %v239 = vpack.c.b16 %v228, %v227
        %v240 = vpack.c.b16 %v230, %v229
        %v241 = vpack.c.b16 %v232, %v231
        %v242 = vpack.c.b16 %v234, %v233
        %v245 = vunpack.c.l.b16 %v201
        %v246 = vunpack.c.h.b16 %v201
        %v247 = vunpack.c.l.b16 %v202
        %v248 = vunpack.c.h.b16 %v202
        %v249 = vpack.c.b16 %v247, %v245
        %v250 = vpack.c.b16 %v248, %v246
        %vm253 = vcmask 130048
        %v255 = vsel %vm253, %v235, 0
        %v258 = vsel %vm253, %v236, 0
        %v261 = vsel %vm253, %v237, 0
        %v264 = vsel %vm253, %v238, 0
        %v267 = vsel %vm253, %v239, 0
        %v270 = vsel %vm253, %v240, 0
        %v273 = vsel %vm253, %v241, 0
        %v276 = vsel %vm253, %v242, 0
        %278 = vmatprep.subr.bf16.mxu0 %v250
        %279 = vmatpush1.bf16.msra.mxu0 %v249
        %280 = vmatprep.subr.bf16.mxu0 0
        %281 = vmatpush1.bf16.msra.mxu0 0
        %282 = vmatprep.subr.bf16.mxu0 0
        %283 = vmatpush1.bf16.msra.mxu0 0
        %284 = vmatprep.subr.bf16.mxu0 0
        %285 = vmatpush1.bf16.msra.mxu0 0
        %286 = vmatprep.subr.bf16.mxu0 0
        %287 = vmatpush1.bf16.msra.mxu0 0
        %288 = vmatprep.subr.bf16.mxu0 0
        %289 = vmatpush1.bf16.msra.mxu0 0
        %290 = vmatprep.subr.bf16.mxu0 0
        %291 = vmatpush1.bf16.msra.mxu0 0
        %292 = vmatprep.subr.bf16.mxu0 0
        %293 = vmatpush1.bf16.msra.mxu0 0
        %294 = vmatprep.subr.bf16.mxu0 0
        %295 = vmatpush1.bf16.msra.mxu0 0
        %296 = vmatprep.subr.bf16.mxu0 0
        %297 = vmatpush1.bf16.msra.mxu0 0
        %298 = vmatprep.subr.bf16.mxu0 0
        %299 = vmatpush1.bf16.msra.mxu0 0
        %300 = vmatprep.subr.bf16.mxu0 0
        %301 = vmatpush1.bf16.msra.mxu0 0
        %302 = vmatprep.subr.bf16.mxu0 0
        %303 = vmatpush1.bf16.msra.mxu0 0
        %304 = vmatprep.subr.bf16.mxu0 0
        %305 = vmatpush1.bf16.msra.mxu0 0
        %306 = vmatprep.subr.bf16.mxu0 0
        %307 = vmatpush1.bf16.msra.mxu0 0
        %308 = vmatprep.subr.bf16.mxu0 0
        %309 = vmatpush1.bf16.msra.mxu0 0
        %310 = vmatprep.mubr.bf16.mxu0 0
        %311 = vmatmul.mubr.bf16.gmra.mrb[0].mxu0 %v255
        %v312 = vpop.f32.mrb[0].mxu0
        %v313 = vadd.f32 0.0, %v312
        %v314 = vpop.f32.mrb[0].mxu0
        %v315 = vadd.f32 0.0, %v314
        %v316 = vpop.f32.mrb[0].mxu0
        %v317 = vadd.f32 0.0, %v316
        %v318 = vpop.f32.mrb[0].mxu0
        %v319 = vadd.f32 0.0, %v318
        %320 = vmatprep.mubr.bf16.mxu0 0
        %321 = vmatmul.mubr.bf16.gmra.mrb[0].mxu0 %v258
        %v322 = vpop.f32.mrb[0].mxu0
        %v323 = vadd.f32 0.0, %v322
        %v324 = vpop.f32.mrb[0].mxu0
        %v325 = vadd.f32 0.0, %v324
        %v326 = vpop.f32.mrb[0].mxu0
        %v327 = vadd.f32 0.0, %v326
        %v328 = vpop.f32.mrb[0].mxu0
        %v329 = vadd.f32 0.0, %v328
        %330 = vmatprep.mubr.bf16.mxu0 0
        %331 = vmatmul.mubr.bf16.gmra.mrb[0].mxu0 %v261
        %v332 = vpop.f32.mrb[0].mxu0
        %v333 = vadd.f32 0.0, %v332
        %v334 = vpop.f32.mrb[0].mxu0
        %v335 = vadd.f32 0.0, %v334
        %v336 = vpop.f32.mrb[0].mxu0
        %v337 = vadd.f32 0.0, %v336
        %v338 = vpop.f32.mrb[0].mxu0
        %v339 = vadd.f32 0.0, %v338
        %340 = vmatprep.mubr.bf16.mxu0 0
        %341 = vmatmul.mubr.bf16.gmra.mrb[0].mxu0 %v264
        %v342 = vpop.f32.mrb[0].mxu0
        %v343 = vadd.f32 0.0, %v342
        %v344 = vpop.f32.mrb[0].mxu0
        %v345 = vadd.f32 0.0, %v344
        %v346 = vpop.f32.mrb[0].mxu0
        %v347 = vadd.f32 0.0, %v346
        %v348 = vpop.f32.mrb[0].mxu0
        %v349 = vadd.f32 0.0, %v348
        %350 = vmatprep.mubr.bf16.mxu0 0
        %351 = vmatmul.mubr.bf16.gmra.mrb[0].mxu0 %v267
        %v352 = vpop.f32.mrb[0].mxu0
        %v353 = vadd.f32 0.0, %v352
        %v354 = vpop.f32.mrb[0].mxu0
        %v355 = vadd.f32 0.0, %v354
        %v356 = vpop.f32.mrb[0].mxu0
        %v357 = vadd.f32 0.0, %v356
        %v358 = vpop.f32.mrb[0].mxu0
        %v359 = vadd.f32 0.0, %v358
        %360 = vmatprep.mubr.bf16.mxu0 0
        %361 = vmatmul.mubr.bf16.gmra.mrb[0].mxu0 %v270
        %v362 = vpop.f32.mrb[0].mxu0
        %v363 = vadd.f32 0.0, %v362
        %v364 = vpop.f32.mrb[0].mxu0
        %v365 = vadd.f32 0.0, %v364
        %v366 = vpop.f32.mrb[0].mxu0
        %v367 = vadd.f32 0.0, %v366
        %v368 = vpop.f32.mrb[0].mxu0
        %v369 = vadd.f32 0.0, %v368
        %370 = vmatprep.mubr.bf16.mxu0 0
        %371 = vmatmul.mubr.bf16.gmra.mrb[0].mxu0 %v273
        %v372 = vpop.f32.mrb[0].mxu0
        %v373 = vadd.f32 0.0, %v372
        %v374 = vpop.f32.mrb[0].mxu0
        %v375 = vadd.f32 0.0, %v374
        %v376 = vpop.f32.mrb[0].mxu0
        %v377 = vadd.f32 0.0, %v376
        %v378 = vpop.f32.mrb[0].mxu0
        %v379 = vadd.f32 0.0, %v378
        %380 = vmatprep.mubr.bf16.mxu0 0
        %381 = vmatmul.mubr.bf16.gmra.mrb[0].mxu0 %v276
        %v382 = vpop.f32.mrb[0].mxu0
        %v383 = vadd.f32 0.0, %v382
        %v384 = vpop.f32.mrb[0].mxu0
        %v385 = vadd.f32 0.0, %v384
        %v386 = vpop.f32.mrb[0].mxu0
        %v387 = vadd.f32 0.0, %v386
        %v388 = vpop.f32.mrb[0].mxu0
        %v389 = vadd.f32 0.0, %v388
        %390 = vdwg.mxu0
        %v391 = vpack.c.bf16 %v317, %v313
        %v392 = vpack.c.bf16 %v327, %v323
        %v393 = vpack.c.bf16 %v337, %v333
        %v394 = vpack.c.bf16 %v347, %v343
        %v395 = vpack.c.bf16 %v357, %v353
        %v396 = vpack.c.bf16 %v367, %v363
        %v397 = vpack.c.bf16 %v377, %v373
        %v398 = vpack.c.bf16 %v387, %v383
        %v407 = vunpack.c.l.b16 %v391
        %v408 = vunpack.c.h.b16 %v391
        %v409 = vunpack.c.l.b16 %v392
        %v410 = vunpack.c.h.b16 %v392
        %v411 = vunpack.c.l.b16 %v393
        %v412 = vunpack.c.h.b16 %v393
        %v413 = vunpack.c.l.b16 %v394
        %v414 = vunpack.c.h.b16 %v394
        %v415 = vunpack.c.l.b16 %v395
        %v416 = vunpack.c.h.b16 %v395
        %v417 = vunpack.c.l.b16 %v396
        %v418 = vunpack.c.h.b16 %v396
        %v419 = vunpack.c.l.b16 %v397
        %v420 = vunpack.c.h.b16 %v397
        %v421 = vunpack.c.l.b16 %v398
        %v422 = vunpack.c.h.b16 %v398
        %v423 = vpack.c.b16 %v407, %v407
        %v424 = vpack.c.b16 %v408, %v408
        %v425 = vpack.c.b16 %v409, %v409
        %v426 = vpack.c.b16 %v410, %v410
        %v427 = vpack.c.b16 %v411, %v411
        %v428 = vpack.c.b16 %v412, %v412
        %v429 = vpack.c.b16 %v413, %v413
        %v430 = vpack.c.b16 %v414, %v414
        %v431 = vpack.c.b16 %v415, %v415
        %v432 = vpack.c.b16 %v416, %v416
        %v433 = vpack.c.b16 %v417, %v417
        %v434 = vpack.c.b16 %v418, %v418
        %v435 = vpack.c.b16 %v419, %v419
        %v436 = vpack.c.b16 %v420, %v420
        %v437 = vpack.c.b16 %v421, %v421
        %v438 = vpack.c.b16 %v422, %v422
        %455 = vst [vmem:[%s168] sm:$0xf] %v423
        %456 = vst [vmem:[%s168 + $0x4] sm:$0xf] %v424
        %457 = vst [vmem:[%s168 + $0x8] sm:$0xf] %v425
        %458 = vst [vmem:[%s168 + $0xc] sm:$0xf] %v426
        %459 = vst [vmem:[%s168 + $0x10] sm:$0xf] %v427
        %460 = vst [vmem:[%s168 + $0x14] sm:$0xf] %v428
        %461 = vst [vmem:[%s168 + $0x18] sm:$0xf] %v429
        %462 = vst [vmem:[%s168 + $0x1c] sm:$0xf] %v430
        %463 = vst [vmem:[%s168 + $0x20] sm:$0xf] %v431
        %464 = vst [vmem:[%s168 + $0x24] sm:$0xf] %v432
        %465 = vst [vmem:[%s168 + $0x28] sm:$0xf] %v433
        %466 = vst [vmem:[%s168 + $0x2c] sm:$0xf] %v434
        %467 = vst [vmem:[%s168 + $0x30] sm:$0xf] %v435
        %468 = vst [vmem:[%s168 + $0x34] sm:$0xf] %v436
        %469 = vst [vmem:[%s168 + $0x38] sm:$0xf] %v437
        %470 = vst [vmem:[%s168 + $0x3c] sm:$0xf] %v438
        %v471 = vpack.c.bf16 %v319, %v315
        %v472 = vpack.c.bf16 %v329, %v325
        %v473 = vpack.c.bf16 %v339, %v335
        %v474 = vpack.c.bf16 %v349, %v345
        %v475 = vpack.c.bf16 %v359, %v355
        %v476 = vpack.c.bf16 %v369, %v365
        %v477 = vpack.c.bf16 %v379, %v375
        %v478 = vpack.c.bf16 %v389, %v385
        %v487 = vunpack.c.l.b16 %v471
        %v488 = vunpack.c.h.b16 %v471
        %v489 = vunpack.c.l.b16 %v472
        %v490 = vunpack.c.h.b16 %v472
        %v491 = vunpack.c.l.b16 %v473
        %v492 = vunpack.c.h.b16 %v473
        %v493 = vunpack.c.l.b16 %v474
        %v494 = vunpack.c.h.b16 %v474
        %v495 = vunpack.c.l.b16 %v475
        %v496 = vunpack.c.h.b16 %v475
        %v497 = vunpack.c.l.b16 %v476
        %v498 = vunpack.c.h.b16 %v476
        %v499 = vunpack.c.l.b16 %v477
        %v500 = vunpack.c.h.b16 %v477
        %v501 = vunpack.c.l.b16 %v478
        %v502 = vunpack.c.h.b16 %v478
        %v503 = vpack.c.b16 %v487, %v487
        %v504 = vpack.c.b16 %v488, %v488
        %v505 = vpack.c.b16 %v489, %v489
        %v506 = vpack.c.b16 %v490, %v490
        %v507 = vpack.c.b16 %v491, %v491
        %v508 = vpack.c.b16 %v492, %v492
        %v509 = vpack.c.b16 %v493, %v493
        %v510 = vpack.c.b16 %v494, %v494
        %v511 = vpack.c.b16 %v495, %v495
        %v512 = vpack.c.b16 %v496, %v496
        %v513 = vpack.c.b16 %v497, %v497
        %v514 = vpack.c.b16 %v498, %v498
        %v515 = vpack.c.b16 %v499, %v499
        %v516 = vpack.c.b16 %v500, %v500
        %v517 = vpack.c.b16 %v501, %v501
        %v518 = vpack.c.b16 %v502, %v502
        %535 = vst [vmem:[%s175] sm:$0xf] %v503
        %536 = vst [vmem:[%s175 + $0x4] sm:$0xf] %v504
        %537 = vst [vmem:[%s175 + $0x8] sm:$0xf] %v505
        %538 = vst [vmem:[%s175 + $0xc] sm:$0xf] %v506
        %539 = vst [vmem:[%s175 + $0x10] sm:$0xf] %v507
        %540 = vst [vmem:[%s175 + $0x14] sm:$0xf] %v508
        %541 = vst [vmem:[%s175 + $0x18] sm:$0xf] %v509
        %542 = vst [vmem:[%s175 + $0x1c] sm:$0xf] %v510
        %543 = vst [vmem:[%s175 + $0x20] sm:$0xf] %v511
        %544 = vst [vmem:[%s175 + $0x24] sm:$0xf] %v512
        %545 = vst [vmem:[%s175 + $0x28] sm:$0xf] %v513
        %546 = vst [vmem:[%s175 + $0x2c] sm:$0xf] %v514
        %547 = vst [vmem:[%s175 + $0x30] sm:$0xf] %v515
        %548 = vst [vmem:[%s175 + $0x34] sm:$0xf] %v516
        %549 = vst [vmem:[%s175 + $0x38] sm:$0xf] %v517
        %550 = vst [vmem:[%s175 + $0x3c] sm:$0xf] %v518
        %s551 = sand.u32 %s76, 1
        %s552 = scalar_lea.sflag [#allocation3], %s551
        %s553 = sand.u32 %s76, 1
        %s554 = smul.addr %s553, 64
        %s555 = scalar_lea.vmem [#allocation2], %s554
        %s556 = sand.u32 %s102, 1
        %s557 = scalar_lea.sflag [#allocation5], %s556
        %s558 = sand.u32 %s102, 1
        %s559 = smul.addr %s558, 64
        %s560 = scalar_lea.vmem [#allocation4], %s559
        // Predicated region
        $region29: #{tpu_custom_call.1} parent=27 // pred_check
          %p561 = pneg %p86
        $region30: #{tpu_custom_call.1} parent=27 // pred_check_branch
          %563 = sbr.rel (%p561) target = $region32
        $region31: #{tpu_custom_call.1} parent=27 // pred_region
          %s564 = smul.u32 16, %s21
          %s566 = ssub.s32 1024, 1024
          %567 = vsyncadd %s552, %s566
          %s568 = smul.addr %s564, 64
          %s569 = scalar_lea.hbm %s2, %s568
          %s570 = sshll.u32 %s555, 4
          %s571 = int_to_ptr.vmem [resolvable:$true] %s570
          %576 = dma.vmem_to_hbm [thread:$0]  %s571, 1024, %s569, %s552, 64, 64, 4
        $region32: #{tpu_custom_call.1} parent=27 // pred_fallthru
          _
        // Predicated region
        $region33: #{tpu_custom_call.1} parent=27 // pred_check
          %p577 = pneg %p112
        $region34: #{tpu_custom_call.1} parent=27 // pred_check_branch
          %579 = sbr.rel (%p577) target = $region36
        $region35: #{tpu_custom_call.1} parent=27 // pred_region
          %s580 = smul.u32 16, %s21
          %s582 = ssub.s32 1024, 1024
          %583 = vsyncadd %s557, %s582
          %s584 = smul.addr %s580, 64
          %s585 = scalar_lea.hbm %s3, %s584
          %s586 = sshll.u32 %s560, 4
          %s587 = int_to_ptr.vmem [resolvable:$true] %s586
          %592 = dma.vmem_to_hbm [thread:$0]  %s587, 1024, %s585, %s557, 64, 64, 4
        $region36: #{tpu_custom_call.1} parent=27 // pred_fallthru
          _
      $region28: #{tpu_custom_call.1} parent=5 // pred_fallthru
        _
      %p593 = scmp.le.s32.totalorder 2, %s16
      // Predicated region
      $region37: #{tpu_custom_call.1} parent=5 // pred_check
        %p594 = pneg %p593
      $region38: #{tpu_custom_call.1} parent=5 // pred_check_branch
        %596 = sbr.rel (%p594) target = $region40
      $region39: #{tpu_custom_call.1} parent=5 // pred_region
        %s597 = ssub.s32 %s16, 2
        // Predicated region
        $region41: #{tpu_custom_call.1} parent=39 // pred_check
          %p598 = pneg %p92
        $region42: #{tpu_custom_call.1} parent=39 // pred_check_branch
          %600 = sbr.rel (%p598) target = $region44
        $region43: #{tpu_custom_call.1} parent=39 // pred_region
          %s601 = sand.u32 %s77, 1
          %s602 = scalar_lea.sflag [#allocation3], %s601
          %s603 = sand.u32 %s77, 1
          %s604 = smul.addr %s603, 64
          %s605 = scalar_lea.vmem [#allocation2], %s604
          %606 = dma.done %s602, 1024
        $region44: #{tpu_custom_call.1} parent=39 // pred_fallthru
          _
        // Predicated region
        $region45: #{tpu_custom_call.1} parent=39 // pred_check
          %p607 = pneg %p118
        $region46: #{tpu_custom_call.1} parent=39 // pred_check_branch
          %609 = sbr.rel (%p607) target = $region48
        $region47: #{tpu_custom_call.1} parent=39 // pred_region
          %s610 = sand.u32 %s103, 1
          %s611 = scalar_lea.sflag [#allocation5], %s610
          %s612 = sand.u32 %s103, 1
          %s613 = smul.addr %s612, 64
          %s614 = scalar_lea.vmem [#allocation4], %s613
          %615 = dma.done %s611, 1024
        $region48: #{tpu_custom_call.1} parent=39 // pred_fallthru
          _
      $region40: #{tpu_custom_call.1} parent=5 // pred_fallthru
        _
    $region6: #{tpu_custom_call.1} parent=1 // loop_footer
      %s20 = sadd.s32 1, %s16
    $region7: #{tpu_custom_call.1} parent=1 // loop_footer_branch
      %15 = sbr.rel target = $region3
    $region8: #{tpu_custom_call.1} parent=1 // loop_exit
      _
    %616 = vsyncpa [#allocation3], 1
    %s617 = scalar_lea.sflag [#allocation3], 1
    %618 = vsyncpa %s617, 1
    %619 = vsyncpa [#allocation5], 1
    %s620 = scalar_lea.sflag [#allocation5], 1
    %621 = vsyncpa %s620, 1

</llo_original>
